<compile_context>
chip_gen: v6e
topology: v6e:2x2x1
jax: 0.10.0
libtpu: 0.0.40
codegen_flags: <defaults>
</compile_context>

<pallas_src>
import jax
import jax.numpy as jnp
from jax.experimental import pallas as pl
from jax.experimental.pallas import tpu as pltpu  # noqa: F401  (TPU backend)

N = 8        # graph nodes
P = 49       # per-node positions (49 * 32 = 1568 == fc input dim)
F_IN = 1
F_H = 16
F_OUT = 32


def gcn_fused_kernel(a_ref, at_ref, xt_ref, e_ref, w1t_ref, b1t_ref,
                     w2r_ref, b2_ref, wfc_ref, bfc_ref, o_ref):
    # Shapes:
    #   a_ref   [N, N]         A_hat
    #   at_ref  [N, N]         A_hat^T (wrapper transpose -- layout plumbing)
    #   xt_ref  [P, N]         node features, positions on sublanes, nodes on lanes
    #   e_ref   [N, N*F_H]     expansion matrix, e[m, 16*m + h] = 1
    #   w1t_ref [1, N*F_H]     W1 tiled per node      (w1t[0, 16m+h] = W1[0, h])
    #   b1t_ref [1, N*F_H]     b1 tiled per node
    #   w2r_ref [N*F_H, F_OUT] W2 tiled per node      (w2r[16m+h, o] = W2[h, o])
    #   b2_ref  [1, F_OUT]
    #   wfc_ref [P, F_OUT]     fc weight reshaped to match the h2 flatten order
    #   bfc_ref [1, 1]
    a = a_ref[...]
    at = at_ref[...]
    xt = xt_ref[...]
    e = e_ref[...]

    # ---- layer 1 propagation:  yt[p, m] = (A_hat @ X)[m, p] ----
    yt = jnp.dot(xt, at, preferred_element_type=jnp.float32)          # [P, N]
    # expand node index along lanes: ybig[p, 16m+h] = yt[p, m]
    ybig = jnp.dot(yt, e, preferred_element_type=jnp.float32)         # [P, 128]

    # ---- layer 1:  h1[m, p, h] = relu((A X)[m,p] * W1[h] + b1[h]) ----
    # laid out lane-dense as h1big[p, 16m+h]; dropout == identity at inference.
    h1big = jnp.maximum(ybig * w1t_ref[...] + b1t_ref[...], 0.0)      # [P, 128]

    # ---- mean-over-nodes folded into the second propagation ----
    # mean_n(A_hat @ Z) == colmean(A_hat) @ Z ; expand colmean to [1, 128].
    ones_n = jnp.ones((1, N), jnp.float32)
    colsum = jnp.dot(ones_n, a, preferred_element_type=jnp.float32)   # [1, N]
    amean_big = jnp.dot(colsum, e,
                        preferred_element_type=jnp.float32) * (1.0 / N)  # [1, 128]

    # ---- layer 2 + node mean:  m_mat[p, o] = mean_n(A_hat @ (h1 W2) + b2)[p, o]
    m_mat = jnp.dot(h1big * amean_big, w2r_ref[...],
                    preferred_element_type=jnp.float32) + b2_ref[...]    # [P, F_OUT]

    # ---- fc(1568 -> 1) on the flattened mean, / 28, sigmoid ----
    prod = m_mat * wfc_ref[...]                                        # [P, F_OUT]
    psum = jnp.sum(prod, axis=1, keepdims=True)                        # [P, 1]
    ones_p = jnp.ones((1, P), jnp.float32)
    tot = jnp.dot(ones_p, psum, preferred_element_type=jnp.float32)    # [1, 1]
    logit = (tot + bfc_ref[...]) / 28.0
    o_ref[...] = 1.0 / (1.0 + jnp.exp(-logit))


def gcn_forward(a_hat, x, w1, b1, w2, b2, wfc, bfc):
    # Wrapper does layout plumbing only (transposes / tiles / reshapes / a
    # constant 0-1 expansion matrix); all arithmetic happens in the kernel.
    xt = jnp.transpose(x[:, :, 0])                                 # [P, N]
    at = jnp.transpose(a_hat)                                      # [N, N]
    e = jnp.repeat(jnp.eye(N, dtype=jnp.float32), F_H, axis=1)     # [N, N*F_H]
    w1t = jnp.tile(w1, (1, N))                                     # [1, N*F_H]
    b1t = jnp.tile(b1, (1, N))                                     # [1, N*F_H]
    w2r = jnp.tile(w2, (N, 1))                                     # [N*F_H, F_OUT]
    wfc_r = wfc.reshape(P, F_OUT)                                  # [P, F_OUT]

    return pl.pallas_call(
        gcn_fused_kernel,
        out_shape=jax.ShapeDtypeStruct((1, 1), jnp.float32),
    )(a_hat, at, xt, e, w1t, b1t, w2r, b2, wfc_r, bfc)


def normalized_adjacency(edge_index, num_nodes):
    src, dst = edge_index
    a = jnp.zeros((num_nodes, num_nodes), jnp.float32)
    a = a.at[src, dst].set(1.0)
    a = a + jnp.eye(num_nodes, dtype=jnp.float32)          # add self loops
    deg = jnp.sum(a, axis=1)
    d_inv_sqrt = 1.0 / jnp.sqrt(deg)
    return a * d_inv_sqrt[:, None] * d_inv_sqrt[None, :]


def gcn_reference(a_hat, x, w1, b1, w2, b2, wfc, bfc):
    # pure-JAX reference for correctness checking
    xw1 = jnp.einsum('npi,ih->nph', x, w1)
    h1 = jnp.maximum(jnp.einsum('nm,mph->nph', a_hat, xw1) + b1, 0.0)
    xw2 = jnp.einsum('nph,ho->npo', h1, w2)
    h2 = jnp.einsum('nm,mpo->npo', a_hat, xw2) + b2
    flat = h2.reshape(N, P * F_OUT)
    m = jnp.mean(flat, axis=0, keepdims=True)
    logit = (m @ wfc + bfc) / 28.0
    return jax.nn.sigmoid(logit)


if __name__ == "__main__":
    key = jax.random.PRNGKey(0)
    ks = jax.random.split(key, 8)

    # node features: [N, 49, 1]
    x = jax.random.normal(ks[0], (N, P, F_IN), dtype=jnp.float32)

    # deterministic ring graph (bidirectional edges)
    src = jnp.arange(N, dtype=jnp.int32)
    dst = (src + 1) % N
    edge_index = jnp.stack([jnp.concatenate([src, dst]),
                            jnp.concatenate([dst, src])])
    a_hat = normalized_adjacency(edge_index, N)

    # deterministic parameters (shapes from the module's __init__)
    w1 = 0.3 * jax.random.normal(ks[1], (F_IN, F_H), dtype=jnp.float32)
    b1 = 0.1 * jax.random.normal(ks[2], (1, F_H), dtype=jnp.float32)
    w2 = 0.3 * jax.random.normal(ks[3], (F_H, F_OUT), dtype=jnp.float32)
    b2 = 0.1 * jax.random.normal(ks[4], (1, F_OUT), dtype=jnp.float32)
    wfc = 0.05 * jax.random.normal(ks[5], (P * F_OUT, 1), dtype=jnp.float32)  # (1568, 1)
    bfc = 0.1 * jax.random.normal(ks[6], (1, 1), dtype=jnp.float32)

    out = gcn_forward(a_hat, x, w1, b1, w2, b2, wfc, bfc)
    out = jax.block_until_ready(out)

    ref = gcn_reference(a_hat, x, w1, b1, w2, b2, wfc, bfc)
    assert out.shape == (1, 1), out.shape
    assert jnp.allclose(out, ref, atol=1e-5, rtol=1e-5), (out, ref)
    print("KERNEL_OK")
</pallas_src>

<mosaic_0001>
module attributes {stable_mosaic.version = 11 : i64} {
  func.func @gcn_fused_kernel(%arg0: memref<8x8xf32, #tpu.memory_space<vmem>>, %arg1: memref<8x8xf32, #tpu.memory_space<vmem>>, %arg2: memref<49x8xf32, #tpu.memory_space<vmem>>, %arg3: memref<8x128xf32, #tpu.memory_space<vmem>>, %arg4: memref<1x128xf32, #tpu.memory_space<vmem>>, %arg5: memref<1x128xf32, #tpu.memory_space<vmem>>, %arg6: memref<128x32xf32, #tpu.memory_space<vmem>>, %arg7: memref<1x32xf32, #tpu.memory_space<vmem>>, %arg8: memref<49x32xf32, #tpu.memory_space<vmem>>, %arg9: memref<1x1xf32, #tpu.memory_space<vmem>>, %arg10: memref<1x1xf32, #tpu.memory_space<vmem>>) attributes {dimension_semantics = [], scalar_prefetch = 0 : i64, scratch_operands = 0 : i64, tpu.core_type = #tpu.core_type<tc>} {
    %c0 = arith.constant 0 : index
    %c0_0 = arith.constant 0 : index
    %0 = vector.load %arg0[%c0, %c0_0] : memref<8x8xf32, #tpu.memory_space<vmem>>, vector<8x8xf32>
    %c0_1 = arith.constant 0 : index
    %c0_2 = arith.constant 0 : index
    %1 = vector.load %arg1[%c0_1, %c0_2] : memref<8x8xf32, #tpu.memory_space<vmem>>, vector<8x8xf32>
    %c0_3 = arith.constant 0 : index
    %c0_4 = arith.constant 0 : index
    %2 = vector.load %arg2[%c0_3, %c0_4] : memref<49x8xf32, #tpu.memory_space<vmem>>, vector<49x8xf32>
    %c0_5 = arith.constant 0 : index
    %c0_6 = arith.constant 0 : index
    %3 = vector.load %arg3[%c0_5, %c0_6] : memref<8x128xf32, #tpu.memory_space<vmem>>, vector<8x128xf32>
    %cst = arith.constant dense<0.000000e+00> : vector<49x8xf32>
    %4 = tpu.matmul %2, %1, %cst {dimension_numbers = #tpu.dot_dimension_numbers<[1], [0], [0], [1], [0, 0, 1, 1], [], []>} : vector<49x8xf32>, vector<8x8xf32>, vector<49x8xf32> -> vector<49x8xf32>
    %cst_7 = arith.constant dense<0.000000e+00> : vector<49x128xf32>
    %5 = tpu.matmul %4, %3, %cst_7 {dimension_numbers = #tpu.dot_dimension_numbers<[1], [0], [0], [1], [0, 0, 1, 1], [], []>} : vector<49x8xf32>, vector<8x128xf32>, vector<49x128xf32> -> vector<49x128xf32>
    %c0_8 = arith.constant 0 : index
    %c0_9 = arith.constant 0 : index
    %6 = vector.load %arg4[%c0_8, %c0_9] : memref<1x128xf32, #tpu.memory_space<vmem>>, vector<1x128xf32>
    %7 = vector.broadcast %6 : vector<1x128xf32> to vector<49x128xf32>
    %8 = arith.mulf %5, %7 : vector<49x128xf32>
    %c0_10 = arith.constant 0 : index
    %c0_11 = arith.constant 0 : index
    %9 = vector.load %arg5[%c0_10, %c0_11] : memref<1x128xf32, #tpu.memory_space<vmem>>, vector<1x128xf32>
    %10 = vector.broadcast %9 : vector<1x128xf32> to vector<49x128xf32>
    %11 = arith.addf %8, %10 : vector<49x128xf32>
    %cst_12 = arith.constant 0.000000e+00 : f32
    %12 = vector.broadcast %cst_12 : f32 to vector<49x128xf32>
    %13 = arith.maximumf %11, %12 : vector<49x128xf32>
    %cst_13 = arith.constant 1.000000e+00 : f32
    %14 = vector.broadcast %cst_13 : f32 to vector<1x8xf32>
    %cst_14 = arith.constant dense<0.000000e+00> : vector<1x8xf32>
    %15 = tpu.matmul %14, %0, %cst_14 {dimension_numbers = #tpu.dot_dimension_numbers<[1], [0], [0], [1], [0, 0, 1, 1], [], []>} : vector<1x8xf32>, vector<8x8xf32>, vector<1x8xf32> -> vector<1x8xf32>
    %cst_15 = arith.constant dense<0.000000e+00> : vector<1x128xf32>
    %16 = tpu.matmul %15, %3, %cst_15 {dimension_numbers = #tpu.dot_dimension_numbers<[1], [0], [0], [1], [0, 0, 1, 1], [], []>} : vector<1x8xf32>, vector<8x128xf32>, vector<1x128xf32> -> vector<1x128xf32>
    %cst_16 = arith.constant 1.250000e-01 : f32
    %17 = vector.broadcast %cst_16 : f32 to vector<1x128xf32>
    %18 = arith.mulf %16, %17 : vector<1x128xf32>
    %19 = vector.broadcast %18 : vector<1x128xf32> to vector<49x128xf32>
    %20 = arith.mulf %13, %19 : vector<49x128xf32>
    %c0_17 = arith.constant 0 : index
    %c0_18 = arith.constant 0 : index
    %21 = vector.load %arg6[%c0_17, %c0_18] : memref<128x32xf32, #tpu.memory_space<vmem>>, vector<128x32xf32>
    %cst_19 = arith.constant dense<0.000000e+00> : vector<49x32xf32>
    %22 = tpu.matmul %20, %21, %cst_19 {dimension_numbers = #tpu.dot_dimension_numbers<[1], [0], [0], [1], [0, 0, 1, 1], [], []>} : vector<49x128xf32>, vector<128x32xf32>, vector<49x32xf32> -> vector<49x32xf32>
    %c0_20 = arith.constant 0 : index
    %c0_21 = arith.constant 0 : index
    %23 = vector.load %arg7[%c0_20, %c0_21] : memref<1x32xf32, #tpu.memory_space<vmem>>, vector<1x32xf32>
    %24 = vector.broadcast %23 : vector<1x32xf32> to vector<49x32xf32>
    %25 = arith.addf %22, %24 : vector<49x32xf32>
    %c0_22 = arith.constant 0 : index
    %c0_23 = arith.constant 0 : index
    %26 = vector.load %arg8[%c0_22, %c0_23] : memref<49x32xf32, #tpu.memory_space<vmem>>, vector<49x32xf32>
    %27 = arith.mulf %25, %26 : vector<49x32xf32>
    %cst_24 = arith.constant dense<0.000000e+00> : vector<49xf32>
    %28 = vector.multi_reduction <add>, %27, %cst_24 [1] : vector<49x32xf32> to vector<49xf32>
    %29 = vector.shape_cast %28 : vector<49xf32> to vector<49x1xf32>
    %cst_25 = arith.constant 1.000000e+00 : f32
    %30 = vector.broadcast %cst_25 : f32 to vector<1x49xf32>
    %cst_26 = arith.constant dense<0.000000e+00> : vector<1x1xf32>
    %31 = tpu.matmul %30, %29, %cst_26 {dimension_numbers = #tpu.dot_dimension_numbers<[1], [0], [0], [1], [0, 0, 1, 1], [], []>} : vector<1x49xf32>, vector<49x1xf32>, vector<1x1xf32> -> vector<1x1xf32>
    %c0_27 = arith.constant 0 : index
    %c0_28 = arith.constant 0 : index
    %32 = vector.load %arg9[%c0_27, %c0_28] : memref<1x1xf32, #tpu.memory_space<vmem>>, vector<1x1xf32>
    %33 = arith.addf %31, %32 : vector<1x1xf32>
    %cst_29 = arith.constant 2.800000e+01 : f32
    %34 = vector.broadcast %cst_29 : f32 to vector<1x1xf32>
    %35 = arith.divf %33, %34 : vector<1x1xf32>
    %cst_30 = arith.constant 0.000000e+00 : f32
    %36 = vector.broadcast %cst_30 : f32 to vector<1x1xf32>
    %37 = arith.subf %36, %35 : vector<1x1xf32>
    %38 = math.exp %37 : vector<1x1xf32>
    %cst_31 = arith.constant 1.000000e+00 : f32
    %39 = vector.broadcast %cst_31 : f32 to vector<1x1xf32>
    %40 = arith.addf %39, %38 : vector<1x1xf32>
    %cst_32 = arith.constant 1.000000e+00 : f32
    %41 = vector.broadcast %cst_32 : f32 to vector<1x1xf32>
    %42 = arith.divf %41, %40 : vector<1x1xf32>
    %c0_33 = arith.constant 0 : index
    %c0_34 = arith.constant 0 : index
    %43 = vector.load %arg10[%c0_33, %c0_34] : memref<1x1xf32, #tpu.memory_space<vmem>>, vector<1x1xf32>
    tpu.vector_store %arg10[%c0_33, %c0_34], %42 {strides = array<i32>} : memref<1x1xf32, #tpu.memory_space<vmem>>, vector<1x1xf32>,
    return
  }
}

</mosaic_0001>

<llo_original>
// kernel: tpu_custom_call.1
$region0: #{tpu_custom_call.1}
  #allocation0 [shape = 'u32[]', space=smem, size = 0x4, offset = 0x4, fixed_abs, tag = 'smem constant byte address 0x4 - core index']
  #allocation1 [shape = 'u32[144,128]{1,0:T(1,128)}', space=vmem, size = 0x12000, scoped, tag = 'internal scratch']
  #allocation2 [shape = 'f32[1,1]{1,0:T(1,128)S(1)}', space=vmem, size = 0x200, scoped, tag = 'scoped memory for tpu_custom_call.1']
  %s0 = inlined_call_operand.vmem [shape: f32[8,8], index: 0, kind: input, shape index: {}]
  %s1 = inlined_call_operand.vmem [shape: f32[8,8], index: 1, kind: input, shape index: {}]
  %s2 = inlined_call_operand.vmem [shape: f32[49,8], index: 2, kind: input, shape index: {}]
  %s3 = inlined_call_operand.vmem [shape: f32[8,128], index: 3, kind: input, shape index: {}]
  %s4 = inlined_call_operand.vmem [shape: f32[1,128], index: 4, kind: input, shape index: {}]
  %s5 = inlined_call_operand.vmem [shape: f32[1,128], index: 5, kind: input, shape index: {}]
  %s6 = inlined_call_operand.vmem [shape: f32[128,32], index: 6, kind: input, shape index: {}]
  %s7 = inlined_call_operand.vmem [shape: f32[1,32], index: 7, kind: input, shape index: {}]
  %s8 = inlined_call_operand.vmem [shape: f32[49,32], index: 8, kind: input, shape index: {}]
  %s9 = inlined_call_operand.<no memory space> [shape: f32[1,1], index: 9, kind: input, shape index: {}]
  %s10 = inlined_call_operand.hbm [shape: f32[1,1], index: 10, kind: output, shape index: {}]
  %s11 = sld [smem:[#allocation0]]
  $region50: #{tpu_custom_call.1} parent=0
    _
  %s13 = ssub.s32 1, %s11
  %s14 = scalar_select 0, %s13, %s11
  %v15 = vstv %s9
  %16 = vst [vmem:[#allocation2] sm:$0x1] %v15
  $region1: #{tpu_custom_call.1} parent=0
    #allocation3 [shape = 'u8[512]{0}', space=vmem, size = 0x400, scoped, tag = 'output window, operand 0, single buffered']
    #allocation4 [shape = 's32[1]{0}', space=sflag, size = 0x4, scoped, tag = 'scoped memory for tpu_custom_call.1']
    %17 = vsyncpa [#allocation4], 0
    // Predicated region
    $region2: #{tpu_custom_call.1} parent=1 // pred_check
      _
    $region3: #{tpu_custom_call.1} parent=1 // pred_check_branch
      %19 = sbr.rel (0) target = $region5
    $region4: #{tpu_custom_call.1} parent=1 // pred_region
      _
    $region5: #{tpu_custom_call.1} parent=1 // pred_fallthru
      _
    // Predicated region
    $region6: #{tpu_custom_call.1} parent=1 // pred_check
      _
    $region7: #{tpu_custom_call.1} parent=1 // pred_check_branch
      %21 = sbr.rel (0) target = $region9
    $region8: #{tpu_custom_call.1} parent=1 // pred_region
      _
    $region9: #{tpu_custom_call.1} parent=1 // pred_fallthru
      _
    // Predicated region
    $region10: #{tpu_custom_call.1} parent=1 // pred_check
      _
    $region11: #{tpu_custom_call.1} parent=1 // pred_check_branch
      %23 = sbr.rel (0) target = $region13
    $region12: #{tpu_custom_call.1} parent=1 // pred_region
      _
    $region13: #{tpu_custom_call.1} parent=1 // pred_fallthru
      _
    // Predicated region
    $region14: #{tpu_custom_call.1} parent=1 // pred_check
      _
    $region15: #{tpu_custom_call.1} parent=1 // pred_check_branch
      %25 = sbr.rel (0) target = $region17
    $region16: #{tpu_custom_call.1} parent=1 // pred_region
      _
    $region17: #{tpu_custom_call.1} parent=1 // pred_fallthru
      _
    // Predicated region
    $region18: #{tpu_custom_call.1} parent=1 // pred_check
      _
    $region19: #{tpu_custom_call.1} parent=1 // pred_check_branch
      %27 = sbr.rel (0) target = $region21
    $region20: #{tpu_custom_call.1} parent=1 // pred_region
      _
    $region21: #{tpu_custom_call.1} parent=1 // pred_fallthru
      _
    // Predicated region
    $region22: #{tpu_custom_call.1} parent=1 // pred_check
      _
    $region23: #{tpu_custom_call.1} parent=1 // pred_check_branch
      %29 = sbr.rel (0) target = $region25
    $region24: #{tpu_custom_call.1} parent=1 // pred_region
      _
    $region25: #{tpu_custom_call.1} parent=1 // pred_fallthru
      _
    // Predicated region
    $region26: #{tpu_custom_call.1} parent=1 // pred_check
      _
    $region27: #{tpu_custom_call.1} parent=1 // pred_check_branch
      %31 = sbr.rel (0) target = $region29
    $region28: #{tpu_custom_call.1} parent=1 // pred_region
      _
    $region29: #{tpu_custom_call.1} parent=1 // pred_fallthru
      _
    // Predicated region
    $region30: #{tpu_custom_call.1} parent=1 // pred_check
      _
    $region31: #{tpu_custom_call.1} parent=1 // pred_check_branch
      %33 = sbr.rel (0) target = $region33
    $region32: #{tpu_custom_call.1} parent=1 // pred_region
      _
    $region33: #{tpu_custom_call.1} parent=1 // pred_fallthru
      _
    // Predicated region
    $region34: #{tpu_custom_call.1} parent=1 // pred_check
      _
    $region35: #{tpu_custom_call.1} parent=1 // pred_check_branch
      %35 = sbr.rel (0) target = $region37
    $region36: #{tpu_custom_call.1} parent=1 // pred_region
      _
    $region37: #{tpu_custom_call.1} parent=1 // pred_fallthru
      _
    // Predicated region
    $region38: #{tpu_custom_call.1} parent=1 // pred_check
      _
    $region39: #{tpu_custom_call.1} parent=1 // pred_check_branch
      %37 = sbr.rel (0) target = $region41
    $region40: #{tpu_custom_call.1} parent=1 // pred_region
      _
    $region41: #{tpu_custom_call.1} parent=1 // pred_fallthru
      _
    %v38 = vld [vmem:[%s0] sm:$0xff]
    %v39 = vld [vmem:[%s1] sm:$0xff]
    %v40 = vld [vmem:[%s2] sm:$0xff]
    %v41 = vld [vmem:[%s2 + $0x8] sm:$0xff]
    %v42 = vld [vmem:[%s2 + $0x10] sm:$0xff]
    %v43 = vld [vmem:[%s2 + $0x18] sm:$0xff]
    %v44 = vld [vmem:[%s2 + $0x20] sm:$0xff]
    %v45 = vld [vmem:[%s2 + $0x28] sm:$0xff]
    %v46 = vld [vmem:[%s2 + $0x30] sm:$0x1]
    %v47 = vld [vmem:[%s3] sm:$0xff]
    %vm48 = vcmask 64512
    %v50 = vsel %vm48, %v40, 0
    %v53 = vsel %vm48, %v41, 0
    %v56 = vsel %vm48, %v42, 0
    %v59 = vsel %vm48, %v43, 0
    %v62 = vsel %vm48, %v44, 0
    %v65 = vsel %vm48, %v45, 0
    %v68 = vsel %vm48, %v46, 0
    %70 = vmatprep.subr.mxu0 0.0
    %71 = vmatpush1.msra.mxu0 0.0
    %72 = vmatprep.subr.mxu0 0.0
    %73 = vmatpush1.msra.mxu0 0.0
    %74 = vmatprep.subr.mxu0 0.0
    %75 = vmatpush1.msra.mxu0 0.0
    %76 = vmatprep.subr.mxu0 0.0
    %77 = vmatpush1.msra.mxu0 0.0
    %78 = vmatprep.subr.mxu0 0.0
    %79 = vmatpush1.msra.mxu0 0.0
    %80 = vmatprep.subr.mxu0 0.0
    %81 = vmatpush1.msra.mxu0 0.0
    %82 = vmatprep.subr.mxu0 0.0
    %83 = vmatpush1.msra.mxu0 0.0
    %84 = vmatprep.subr.mxu0 0.0
    %85 = vmatpush1.msra.mxu0 0.0
    %86 = vmatprep.subr.mxu0 0.0
    %87 = vmatpush1.msra.mxu0 0.0
    %88 = vmatprep.subr.mxu0 0.0
    %89 = vmatpush1.msra.mxu0 0.0
    %90 = vmatprep.subr.mxu0 0.0
    %91 = vmatpush1.msra.mxu0 0.0
    %92 = vmatprep.subr.mxu0 0.0
    %93 = vmatpush1.msra.mxu0 0.0
    %94 = vmatprep.subr.mxu0 0.0
    %95 = vmatpush1.msra.mxu0 0.0
    %96 = vmatprep.subr.mxu0 0.0
    %97 = vmatpush1.msra.mxu0 0.0
    %98 = vmatprep.subr.mxu0 0.0
    %99 = vmatpush1.msra.mxu0 0.0
    %100 = vmatprep.subr.mxu0 0.0
    %101 = vmatpush1.msra.mxu0 %v39
    %102 = vmatprep.subr.mxu0 0.0
    %103 = vmatpush2.msra.mxu0 0.0
    %104 = vmatprep.subr.mxu0 0.0
    %105 = vmatpush2.msra.mxu0 0.0
    %106 = vmatprep.subr.mxu0 0.0
    %107 = vmatpush2.msra.mxu0 0.0
    %108 = vmatprep.subr.mxu0 0.0
    %109 = vmatpush2.msra.mxu0 0.0
    %110 = vmatprep.subr.mxu0 0.0
    %111 = vmatpush2.msra.mxu0 0.0
    %112 = vmatprep.subr.mxu0 0.0
    %113 = vmatpush2.msra.mxu0 0.0
    %114 = vmatprep.subr.mxu0 0.0
    %115 = vmatpush2.msra.mxu0 0.0
    %116 = vmatprep.subr.mxu0 0.0
    %117 = vmatpush2.msra.mxu0 0.0
    %118 = vmatprep.subr.mxu0 0.0
    %119 = vmatpush2.msra.mxu0 0.0
    %120 = vmatprep.subr.mxu0 0.0
    %121 = vmatpush2.msra.mxu0 0.0
    %122 = vmatprep.subr.mxu0 0.0
    %123 = vmatpush2.msra.mxu0 0.0
    %124 = vmatprep.subr.mxu0 0.0
    %125 = vmatpush2.msra.mxu0 0.0
    %126 = vmatprep.subr.mxu0 0.0
    %127 = vmatpush2.msra.mxu0 0.0
    %128 = vmatprep.subr.mxu0 0.0
    %129 = vmatpush2.msra.mxu0 0.0
    %130 = vmatprep.subr.mxu0 0.0
    %131 = vmatpush2.msra.mxu0 0.0
    %132 = vmatprep.subr.mxu0 0.0
    %133 = vmatpush2.msra.mxu0 0.0
    %134 = vmatprep.mubr.f32.mxu0 0.0
    %135 = vmatmul.mubr.f32.gmra.mxu0 %v50
    %v136 = vpop.f32.mrf.mxu0
    %v137 = vadd.f32 0.0, %v136
    %v138 = vpop.f32.mrf.mxu0
    %139 = vmatprep.mubr.f32.mxu0 0.0
    %140 = vmatmul.mubr.f32.gmra.mxu0 %v53
    %v141 = vpop.f32.mrf.mxu0
    %v142 = vadd.f32 0.0, %v141
    %v143 = vpop.f32.mrf.mxu0
    %144 = vmatprep.mubr.f32.mxu0 0.0
    %145 = vmatmul.mubr.f32.gmra.mxu0 %v56
    %v146 = vpop.f32.mrf.mxu0
    %v147 = vadd.f32 0.0, %v146
    %v148 = vpop.f32.mrf.mxu0
    %149 = vmatprep.mubr.f32.mxu0 0.0
    %150 = vmatmul.mubr.f32.gmra.mxu0 %v59
    %v151 = vpop.f32.mrf.mxu0
    %v152 = vadd.f32 0.0, %v151
    %v153 = vpop.f32.mrf.mxu0
    %154 = vmatprep.mubr.f32.mxu0 0.0
    %155 = vmatmul.mubr.f32.gmra.mxu0 %v62
    %v156 = vpop.f32.mrf.mxu0
    %v157 = vadd.f32 0.0, %v156
    %v158 = vpop.f32.mrf.mxu0
    %159 = vmatprep.mubr.f32.mxu0 0.0
    %160 = vmatmul.mubr.f32.gmra.mxu0 %v65
    %v161 = vpop.f32.mrf.mxu0
    %v162 = vadd.f32 0.0, %v161
    %v163 = vpop.f32.mrf.mxu0
    %164 = vmatprep.mubr.f32.mxu0 0.0
    %165 = vmatmul.mubr.f32.gmra.mxu0 %v68
    %v166 = vpop.f32.mrf.mxu0
    %v167 = vadd.f32 0.0, %v166
    %v168 = vpop.f32.mrf.mxu0
    %169 = vdwg.mxu0
    %v171 = vsel %vm48, %v137, 0
    %v174 = vsel %vm48, %v142, 0
    %v177 = vsel %vm48, %v147, 0
    %v180 = vsel %vm48, %v152, 0
    %v183 = vsel %vm48, %v157, 0
    %v186 = vsel %vm48, %v162, 0
    %v189 = vsel %vm48, %v167, 0
    %191 = vmatprep.subr.mxu0 0.0
    %192 = vmatpush1.msra.mxu0 0.0
    %193 = vmatprep.subr.mxu0 0.0
    %194 = vmatpush1.msra.mxu0 0.0
    %195 = vmatprep.subr.mxu0 0.0
    %196 = vmatpush1.msra.mxu0 0.0
    %197 = vmatprep.subr.mxu0 0.0
    %198 = vmatpush1.msra.mxu0 0.0
    %199 = vmatprep.subr.mxu0 0.0
    %200 = vmatpush1.msra.mxu0 0.0
    %201 = vmatprep.subr.mxu0 0.0
    %202 = vmatpush1.msra.mxu0 0.0
    %203 = vmatprep.subr.mxu0 0.0
    %204 = vmatpush1.msra.mxu0 0.0
    %205 = vmatprep.subr.mxu0 0.0
    %206 = vmatpush1.msra.mxu0 0.0
    %207 = vmatprep.subr.mxu0 0.0
    %208 = vmatpush1.msra.mxu0 0.0
    %209 = vmatprep.subr.mxu0 0.0
    %210 = vmatpush1.msra.mxu0 0.0
    %211 = vmatprep.subr.mxu0 0.0
    %212 = vmatpush1.msra.mxu0 0.0
    %213 = vmatprep.subr.mxu0 0.0
    %214 = vmatpush1.msra.mxu0 0.0
    %215 = vmatprep.subr.mxu0 0.0
    %216 = vmatpush1.msra.mxu0 0.0
    %217 = vmatprep.subr.mxu0 0.0
    %218 = vmatpush1.msra.mxu0 0.0
    %219 = vmatprep.subr.mxu0 0.0
    %220 = vmatpush1.msra.mxu0 0.0
    %221 = vmatprep.subr.mxu0 0.0
    %222 = vmatpush1.msra.mxu0 %v47
    %223 = vmatprep.subr.mxu0 0.0
    %224 = vmatpush2.msra.mxu0 0.0
    %225 = vmatprep.subr.mxu0 0.0
    %226 = vmatpush2.msra.mxu0 0.0
    %227 = vmatprep.subr.mxu0 0.0
    %228 = vmatpush2.msra.mxu0 0.0
    %229 = vmatprep.subr.mxu0 0.0
    %230 = vmatpush2.msra.mxu0 0.0
    %231 = vmatprep.subr.mxu0 0.0
    %232 = vmatpush2.msra.mxu0 0.0
    %233 = vmatprep.subr.mxu0 0.0
    %234 = vmatpush2.msra.mxu0 0.0
    %235 = vmatprep.subr.mxu0 0.0
    %236 = vmatpush2.msra.mxu0 0.0
    %237 = vmatprep.subr.mxu0 0.0
    %238 = vmatpush2.msra.mxu0 0.0
    %239 = vmatprep.subr.mxu0 0.0
    %240 = vmatpush2.msra.mxu0 0.0
    %241 = vmatprep.subr.mxu0 0.0
    %242 = vmatpush2.msra.mxu0 0.0
    %243 = vmatprep.subr.mxu0 0.0
    %244 = vmatpush2.msra.mxu0 0.0
    %245 = vmatprep.subr.mxu0 0.0
    %246 = vmatpush2.msra.mxu0 0.0
    %247 = vmatprep.subr.mxu0 0.0
    %248 = vmatpush2.msra.mxu0 0.0
    %249 = vmatprep.subr.mxu0 0.0
    %250 = vmatpush2.msra.mxu0 0.0
    %251 = vmatprep.subr.mxu0 0.0
    %252 = vmatpush2.msra.mxu0 0.0
    %253 = vmatprep.subr.mxu0 0.0
    %254 = vmatpush2.msra.mxu0 0.0
    %255 = vmatprep.mubr.f32.mxu0 0.0
    %256 = vmatmul.mubr.f32.gmra.mxu0 %v171
    %v257 = vpop.f32.mrf.mxu0
    %v258 = vadd.f32 0.0, %v257
    %v259 = vpop.f32.mrf.mxu0
    %260 = vmatprep.mubr.f32.mxu0 0.0
    %261 = vmatmul.mubr.f32.gmra.mxu0 %v174
    %v262 = vpop.f32.mrf.mxu0
    %v263 = vadd.f32 0.0, %v262
    %v264 = vpop.f32.mrf.mxu0
    %265 = vmatprep.mubr.f32.mxu0 0.0
    %266 = vmatmul.mubr.f32.gmra.mxu0 %v177
    %v267 = vpop.f32.mrf.mxu0
    %v268 = vadd.f32 0.0, %v267
    %v269 = vpop.f32.mrf.mxu0
    %270 = vmatprep.mubr.f32.mxu0 0.0
    %271 = vmatmul.mubr.f32.gmra.mxu0 %v180
    %v272 = vpop.f32.mrf.mxu0
    %v273 = vadd.f32 0.0, %v272
    %v274 = vpop.f32.mrf.mxu0
    %275 = vmatprep.mubr.f32.mxu0 0.0
    %276 = vmatmul.mubr.f32.gmra.mxu0 %v183
    %v277 = vpop.f32.mrf.mxu0
    %v278 = vadd.f32 0.0, %v277
    %v279 = vpop.f32.mrf.mxu0
    %280 = vmatprep.mubr.f32.mxu0 0.0
    %281 = vmatmul.mubr.f32.gmra.mxu0 %v186
    %v282 = vpop.f32.mrf.mxu0
    %v283 = vadd.f32 0.0, %v282
    %v284 = vpop.f32.mrf.mxu0
    %285 = vmatprep.mubr.f32.mxu0 0.0
    %286 = vmatmul.mubr.f32.gmra.mxu0 %v189
    %v287 = vpop.f32.mrf.mxu0
    %v288 = vadd.f32 0.0, %v287
    %v289 = vpop.f32.mrf.mxu0
    %290 = vdwg.mxu0
    %v291 = vld [vmem:[%s4] sm:$0x1]
    %v293 = vlaneseq
    %v294 = vshrl.u32 %v293, 7
    %v295 = vsub.s32 0, %v294
    %v296 = vrot.slane %v291, %v295
    %v298 = vmul.f32 %v258, %v296
    %v299 = vmul.f32 %v263, %v296
    %v300 = vmul.f32 %v268, %v296
    %v301 = vmul.f32 %v273, %v296
    %v302 = vmul.f32 %v278, %v296
    %v303 = vmul.f32 %v283, %v296
    %v304 = vmul.f32 %v288, %v296
    %v305 = vld [vmem:[%s5] sm:$0x1]
    %v307 = vlaneseq
    %v308 = vshrl.u32 %v307, 7
    %v309 = vsub.s32 0, %v308
    %v310 = vrot.slane %v305, %v309
    %v312 = vadd.f32 %v298, %v310
    %v313 = vadd.f32 %v299, %v310
    %v314 = vadd.f32 %v300, %v310
    %v315 = vadd.f32 %v301, %v310
    %v316 = vadd.f32 %v302, %v310
    %v317 = vadd.f32 %v303, %v310
    %v318 = vadd.f32 %v304, %v310
    %v319 = vmax.f32 %v312, 0.0
    %v320 = vmax.f32 %v313, 0.0
    %v321 = vmax.f32 %v314, 0.0
    %v322 = vmax.f32 %v315, 0.0
    %v323 = vmax.f32 %v316, 0.0
    %v324 = vmax.f32 %v317, 0.0
    %v325 = vmax.f32 %v318, 0.0
    %v327 = vsel %vm48, 1.0, 0
    %329 = vmatprep.subr.mxu0 0.0
    %330 = vmatpush1.msra.mxu0 0.0
    %331 = vmatprep.subr.mxu0 0.0
    %332 = vmatpush1.msra.mxu0 0.0
    %333 = vmatprep.subr.mxu0 0.0
    %334 = vmatpush1.msra.mxu0 0.0
    %335 = vmatprep.subr.mxu0 0.0
    %336 = vmatpush1.msra.mxu0 0.0
    %337 = vmatprep.subr.mxu0 0.0
    %338 = vmatpush1.msra.mxu0 0.0
    %339 = vmatprep.subr.mxu0 0.0
    %340 = vmatpush1.msra.mxu0 0.0
    %341 = vmatprep.subr.mxu0 0.0
    %342 = vmatpush1.msra.mxu0 0.0
    %343 = vmatprep.subr.mxu0 0.0
    %344 = vmatpush1.msra.mxu0 0.0
    %345 = vmatprep.subr.mxu0 0.0
    %346 = vmatpush1.msra.mxu0 0.0
    %347 = vmatprep.subr.mxu0 0.0
    %348 = vmatpush1.msra.mxu0 0.0
    %349 = vmatprep.subr.mxu0 0.0
    %350 = vmatpush1.msra.mxu0 0.0
    %351 = vmatprep.subr.mxu0 0.0
    %352 = vmatpush1.msra.mxu0 0.0
    %353 = vmatprep.subr.mxu0 0.0
    %354 = vmatpush1.msra.mxu0 0.0
    %355 = vmatprep.subr.mxu0 0.0
    %356 = vmatpush1.msra.mxu0 0.0
    %357 = vmatprep.subr.mxu0 0.0
    %358 = vmatpush1.msra.mxu0 0.0
    %359 = vmatprep.subr.mxu0 0.0
    %360 = vmatpush1.msra.mxu0 %v38
    %361 = vmatprep.subr.mxu0 0.0
    %362 = vmatpush2.msra.mxu0 0.0
    %363 = vmatprep.subr.mxu0 0.0
    %364 = vmatpush2.msra.mxu0 0.0
    %365 = vmatprep.subr.mxu0 0.0
    %366 = vmatpush2.msra.mxu0 0.0
    %367 = vmatprep.subr.mxu0 0.0
    %368 = vmatpush2.msra.mxu0 0.0
    %369 = vmatprep.subr.mxu0 0.0
    %370 = vmatpush2.msra.mxu0 0.0
    %371 = vmatprep.subr.mxu0 0.0
    %372 = vmatpush2.msra.mxu0 0.0
    %373 = vmatprep.subr.mxu0 0.0
    %374 = vmatpush2.msra.mxu0 0.0
    %375 = vmatprep.subr.mxu0 0.0
    %376 = vmatpush2.msra.mxu0 0.0
    %377 = vmatprep.subr.mxu0 0.0
    %378 = vmatpush2.msra.mxu0 0.0
    %379 = vmatprep.subr.mxu0 0.0
    %380 = vmatpush2.msra.mxu0 0.0
    %381 = vmatprep.subr.mxu0 0.0
    %382 = vmatpush2.msra.mxu0 0.0
    %383 = vmatprep.subr.mxu0 0.0
    %384 = vmatpush2.msra.mxu0 0.0
    %385 = vmatprep.subr.mxu0 0.0
    %386 = vmatpush2.msra.mxu0 0.0
    %387 = vmatprep.subr.mxu0 0.0
    %388 = vmatpush2.msra.mxu0 0.0
    %389 = vmatprep.subr.mxu0 0.0
    %390 = vmatpush2.msra.mxu0 0.0
    %391 = vmatprep.subr.mxu0 0.0
    %392 = vmatpush2.msra.mxu0 0.0
    %393 = vmatprep.mubr.f32.mxu0 0.0
    %394 = vmatmul.mubr.f32.gmra.mxu0 %v327
    %v395 = vpop.f32.mrf.mxu0
    %v396 = vadd.f32 0.0, %v395
    %v397 = vpop.f32.mrf.mxu0
    %398 = vdwg.mxu0
    %v400 = vsel %vm48, %v396, 0
    %402 = vmatprep.subr.mxu0 0.0
    %403 = vmatpush1.msra.mxu0 0.0
    %404 = vmatprep.subr.mxu0 0.0
    %405 = vmatpush1.msra.mxu0 0.0
    %406 = vmatprep.subr.mxu0 0.0
    %407 = vmatpush1.msra.mxu0 0.0
    %408 = vmatprep.subr.mxu0 0.0
    %409 = vmatpush1.msra.mxu0 0.0
    %410 = vmatprep.subr.mxu0 0.0
    %411 = vmatpush1.msra.mxu0 0.0
    %412 = vmatprep.subr.mxu0 0.0
    %413 = vmatpush1.msra.mxu0 0.0
    %414 = vmatprep.subr.mxu0 0.0
    %415 = vmatpush1.msra.mxu0 0.0
    %416 = vmatprep.subr.mxu0 0.0
    %417 = vmatpush1.msra.mxu0 0.0
    %418 = vmatprep.subr.mxu0 0.0
    %419 = vmatpush1.msra.mxu0 0.0
    %420 = vmatprep.subr.mxu0 0.0
    %421 = vmatpush1.msra.mxu0 0.0
    %422 = vmatprep.subr.mxu0 0.0
    %423 = vmatpush1.msra.mxu0 0.0
    %424 = vmatprep.subr.mxu0 0.0
    %425 = vmatpush1.msra.mxu0 0.0
    %426 = vmatprep.subr.mxu0 0.0
    %427 = vmatpush1.msra.mxu0 0.0
    %428 = vmatprep.subr.mxu0 0.0
    %429 = vmatpush1.msra.mxu0 0.0
    %430 = vmatprep.subr.mxu0 0.0
    %431 = vmatpush1.msra.mxu0 0.0
    %432 = vmatprep.subr.mxu0 0.0
    %433 = vmatpush1.msra.mxu0 %v47
    %434 = vmatprep.subr.mxu0 0.0
    %435 = vmatpush2.msra.mxu0 0.0
    %436 = vmatprep.subr.mxu0 0.0
    %437 = vmatpush2.msra.mxu0 0.0
    %438 = vmatprep.subr.mxu0 0.0
    %439 = vmatpush2.msra.mxu0 0.0
    %440 = vmatprep.subr.mxu0 0.0
    %441 = vmatpush2.msra.mxu0 0.0
    %442 = vmatprep.subr.mxu0 0.0
    %443 = vmatpush2.msra.mxu0 0.0
    %444 = vmatprep.subr.mxu0 0.0
    %445 = vmatpush2.msra.mxu0 0.0
    %446 = vmatprep.subr.mxu0 0.0
    %447 = vmatpush2.msra.mxu0 0.0
    %448 = vmatprep.subr.mxu0 0.0
    %449 = vmatpush2.msra.mxu0 0.0
    %450 = vmatprep.subr.mxu0 0.0
    %451 = vmatpush2.msra.mxu0 0.0
    %452 = vmatprep.subr.mxu0 0.0
    %453 = vmatpush2.msra.mxu0 0.0
    %454 = vmatprep.subr.mxu0 0.0
    %455 = vmatpush2.msra.mxu0 0.0
    %456 = vmatprep.subr.mxu0 0.0
    %457 = vmatpush2.msra.mxu0 0.0
    %458 = vmatprep.subr.mxu0 0.0
    %459 = vmatpush2.msra.mxu0 0.0
    %460 = vmatprep.subr.mxu0 0.0
    %461 = vmatpush2.msra.mxu0 0.0
    %462 = vmatprep.subr.mxu0 0.0
    %463 = vmatpush2.msra.mxu0 0.0
    %464 = vmatprep.subr.mxu0 0.0
    %465 = vmatpush2.msra.mxu0 0.0
    %466 = vmatprep.mubr.f32.mxu0 0.0
    %467 = vmatmul.mubr.f32.gmra.mxu0 %v400
    %v468 = vpop.f32.mrf.mxu0
    %v469 = vadd.f32 0.0, %v468
    %v470 = vpop.f32.mrf.mxu0
    %471 = vdwg.mxu0
    %v472 = vmul.f32 %v469, 0.125
    %v473 = vlaneseq
    %v474 = vshrl.u32 %v473, 7
    %v475 = vsub.s32 0, %v474
    %v476 = vrot.slane %v472, %v475
    %v477 = vmul.f32 %v319, %v476
    %v478 = vmul.f32 %v320, %v476
    %v479 = vmul.f32 %v321, %v476
    %v480 = vmul.f32 %v322, %v476
    %v481 = vmul.f32 %v323, %v476
    %v482 = vmul.f32 %v324, %v476
    %v483 = vmul.f32 %v325, %v476
    %v484 = vld [vmem:[%s6] sm:$0xff]
    %v485 = vld [vmem:[%s6 + $0x8] sm:$0xff]
    %v486 = vld [vmem:[%s6 + $0x10] sm:$0xff]
    %v487 = vld [vmem:[%s6 + $0x18] sm:$0xff]
    %v488 = vld [vmem:[%s6 + $0x20] sm:$0xff]
    %v489 = vld [vmem:[%s6 + $0x28] sm:$0xff]
    %v490 = vld [vmem:[%s6 + $0x30] sm:$0xff]
    %v491 = vld [vmem:[%s6 + $0x38] sm:$0xff]
    %v492 = vld [vmem:[%s6 + $0x40] sm:$0xff]
    %v493 = vld [vmem:[%s6 + $0x48] sm:$0xff]
    %v494 = vld [vmem:[%s6 + $0x50] sm:$0xff]
    %v495 = vld [vmem:[%s6 + $0x58] sm:$0xff]
    %v496 = vld [vmem:[%s6 + $0x60] sm:$0xff]
    %v497 = vld [vmem:[%s6 + $0x68] sm:$0xff]
    %v498 = vld [vmem:[%s6 + $0x70] sm:$0xff]
    %v499 = vld [vmem:[%s6 + $0x78] sm:$0xff]
    %v500 = vld [vmem:[%s7] sm:$0x1]
    %v502 = vlaneseq
    %v503 = vshrl.u32 %v502, 7
    %v504 = vsub.s32 0, %v503
    %v505 = vrot.slane %v500, %v504
    %507 = vmatprep.subr.mxu0 0.0
    %508 = vmatpush1.msra.mxu0 %v499
    %509 = vmatprep.subr.mxu0 0.0
    %510 = vmatpush1.msra.mxu0 %v498
    %511 = vmatprep.subr.mxu0 0.0
    %512 = vmatpush1.msra.mxu0 %v497
    %513 = vmatprep.subr.mxu0 0.0
    %514 = vmatpush1.msra.mxu0 %v496
    %515 = vmatprep.subr.mxu0 0.0
    %516 = vmatpush1.msra.mxu0 %v495
    %517 = vmatprep.subr.mxu0 0.0
    %518 = vmatpush1.msra.mxu0 %v494
    %519 = vmatprep.subr.mxu0 0.0
    %520 = vmatpush1.msra.mxu0 %v493
    %521 = vmatprep.subr.mxu0 0.0
    %522 = vmatpush1.msra.mxu0 %v492
    %523 = vmatprep.subr.mxu0 0.0
    %524 = vmatpush1.msra.mxu0 %v491
    %525 = vmatprep.subr.mxu0 0.0
    %526 = vmatpush1.msra.mxu0 %v490
    %527 = vmatprep.subr.mxu0 0.0
    %528 = vmatpush1.msra.mxu0 %v489
    %529 = vmatprep.subr.mxu0 0.0
    %530 = vmatpush1.msra.mxu0 %v488
    %531 = vmatprep.subr.mxu0 0.0
    %532 = vmatpush1.msra.mxu0 %v487
    %533 = vmatprep.subr.mxu0 0.0
    %534 = vmatpush1.msra.mxu0 %v486
    %535 = vmatprep.subr.mxu0 0.0
    %536 = vmatpush1.msra.mxu0 %v485
    %537 = vmatprep.subr.mxu0 0.0
    %538 = vmatpush1.msra.mxu0 %v484
    %539 = vmatprep.subr.mxu0 0.0
    %540 = vmatpush2.msra.mxu0 0.0
    %541 = vmatprep.subr.mxu0 0.0
    %542 = vmatpush2.msra.mxu0 0.0
    %543 = vmatprep.subr.mxu0 0.0
    %544 = vmatpush2.msra.mxu0 0.0
    %545 = vmatprep.subr.mxu0 0.0
    %546 = vmatpush2.msra.mxu0 0.0
    %547 = vmatprep.subr.mxu0 0.0
    %548 = vmatpush2.msra.mxu0 0.0
    %549 = vmatprep.subr.mxu0 0.0
    %550 = vmatpush2.msra.mxu0 0.0
    %551 = vmatprep.subr.mxu0 0.0
    %552 = vmatpush2.msra.mxu0 0.0
    %553 = vmatprep.subr.mxu0 0.0
    %554 = vmatpush2.msra.mxu0 0.0
    %555 = vmatprep.subr.mxu0 0.0
    %556 = vmatpush2.msra.mxu0 0.0
    %557 = vmatprep.subr.mxu0 0.0
    %558 = vmatpush2.msra.mxu0 0.0
    %559 = vmatprep.subr.mxu0 0.0
    %560 = vmatpush2.msra.mxu0 0.0
    %561 = vmatprep.subr.mxu0 0.0
    %562 = vmatpush2.msra.mxu0 0.0
    %563 = vmatprep.subr.mxu0 0.0
    %564 = vmatpush2.msra.mxu0 0.0
    %565 = vmatprep.subr.mxu0 0.0
    %566 = vmatpush2.msra.mxu0 0.0
    %567 = vmatprep.subr.mxu0 0.0
    %568 = vmatpush2.msra.mxu0 0.0
    %569 = vmatprep.subr.mxu0 0.0
    %570 = vmatpush2.msra.mxu0 0.0
    %571 = vmatprep.mubr.f32.mxu0 0.0
    %572 = vmatmul.mubr.f32.gmra.mxu0 %v477
    %v573 = vpop.f32.mrf.mxu0
    %v574 = vadd.f32 %v505, %v573
    %v575 = vpop.f32.mrf.mxu0
    %576 = vmatprep.mubr.f32.mxu0 0.0
    %577 = vmatmul.mubr.f32.gmra.mxu0 %v478
    %v578 = vpop.f32.mrf.mxu0
    %v579 = vadd.f32 %v505, %v578
    %v580 = vpop.f32.mrf.mxu0
    %581 = vmatprep.mubr.f32.mxu0 0.0
    %582 = vmatmul.mubr.f32.gmra.mxu0 %v479
    %v583 = vpop.f32.mrf.mxu0
    %v584 = vadd.f32 %v505, %v583
    %v585 = vpop.f32.mrf.mxu0
    %586 = vmatprep.mubr.f32.mxu0 0.0
    %587 = vmatmul.mubr.f32.gmra.mxu0 %v480
    %v588 = vpop.f32.mrf.mxu0
    %v589 = vadd.f32 %v505, %v588
    %v590 = vpop.f32.mrf.mxu0
    %591 = vmatprep.mubr.f32.mxu0 0.0
    %592 = vmatmul.mubr.f32.gmra.mxu0 %v481
    %v593 = vpop.f32.mrf.mxu0
    %v594 = vadd.f32 %v505, %v593
    %v595 = vpop.f32.mrf.mxu0
    %596 = vmatprep.mubr.f32.mxu0 0.0
    %597 = vmatmul.mubr.f32.gmra.mxu0 %v482
    %v598 = vpop.f32.mrf.mxu0
    %v599 = vadd.f32 %v505, %v598
    %v600 = vpop.f32.mrf.mxu0
    %601 = vmatprep.mubr.f32.mxu0 0.0
    %602 = vmatmul.mubr.f32.gmra.mxu0 %v483
    %v603 = vpop.f32.mrf.mxu0
    %v604 = vadd.f32 %v505, %v603
    %v605 = vpop.f32.mrf.mxu0
    %606 = vdwg.mxu0
    %v607 = vld [vmem:[%s8] sm:$0xff]
    %v608 = vld [vmem:[%s8 + $0x8] sm:$0xff]
    %v609 = vld [vmem:[%s8 + $0x10] sm:$0xff]
    %v610 = vld [vmem:[%s8 + $0x18] sm:$0xff]
    %v611 = vld [vmem:[%s8 + $0x20] sm:$0xff]
    %v612 = vld [vmem:[%s8 + $0x28] sm:$0xff]
    %v613 = vld [vmem:[%s8 + $0x30] sm:$0x1]
    %v614 = vmul.f32 %v574, %v607
    %v615 = vmul.f32 %v579, %v608
    %v616 = vmul.f32 %v584, %v609
    %v617 = vmul.f32 %v589, %v610
    %v618 = vmul.f32 %v594, %v611
    %v619 = vmul.f32 %v599, %v612
    %v620 = vmul.f32 %v604, %v613
    %vm621 = vcmask 261120
    %v622 = vsel %vm621, %v614, 0.0
    %623 = vadd.xlane.f32.xlu0 %v622
    %v624 = vpop.xlane.xlu0 %623
    %v625 = vsel %vm621, %v615, 0.0
    %626 = vadd.xlane.f32.xlu0 %v625
    %v627 = vpop.xlane.xlu0 %626
    %v628 = vsel %vm621, %v616, 0.0
    %629 = vadd.xlane.f32.xlu0 %v628
    %v630 = vpop.xlane.xlu0 %629
    %v631 = vsel %vm621, %v617, 0.0
    %632 = vadd.xlane.f32.xlu0 %v631
    %v633 = vpop.xlane.xlu0 %632
    %v634 = vsel %vm621, %v618, 0.0
    %635 = vadd.xlane.f32.xlu0 %v634
    %v636 = vpop.xlane.xlu0 %635
    %v637 = vsel %vm621, %v619, 0.0
    %638 = vadd.xlane.f32.xlu0 %v637
    %v639 = vpop.xlane.xlu0 %638
    %vm640 = vcmask 253952
    %v641 = vsel %vm640, %v620, 0.0
    %642 = vadd.xlane.f32.xlu0 %v641
    %v643 = vpop.xlane.xlu0 %642
    %v644 = vld [vmem:[#allocation2] sm:$0x1]
    %vm645 = vcmask 400384
    %v646 = vsel %vm645, 1.0, 0
    %vm648 = vcmask 1040384
    %v650 = vsel %vm648, %v643, 0
    %652 = vmatprep.subr.mxu0 0.0
    %653 = vmatpush1.msra.mxu0 0.0
    %654 = vmatprep.subr.mxu0 0.0
    %655 = vmatpush1.msra.mxu0 0.0
    %656 = vmatprep.subr.mxu0 0.0
    %657 = vmatpush1.msra.mxu0 0.0
    %658 = vmatprep.subr.mxu0 0.0
    %659 = vmatpush1.msra.mxu0 0.0
    %660 = vmatprep.subr.mxu0 0.0
    %661 = vmatpush1.msra.mxu0 0.0
    %662 = vmatprep.subr.mxu0 0.0
    %663 = vmatpush1.msra.mxu0 0.0
    %664 = vmatprep.subr.mxu0 0.0
    %665 = vmatpush1.msra.mxu0 0.0
    %666 = vmatprep.subr.mxu0 0.0
    %667 = vmatpush1.msra.mxu0 0.0
    %668 = vmatprep.subr.mxu0 0.0
    %669 = vmatpush1.msra.mxu0 0.0
    %670 = vmatprep.subr.mxu0 0.0
    %671 = vmatpush1.msra.mxu0 %v650
    %672 = vmatprep.subr.mxu0 0.0
    %673 = vmatpush1.msra.mxu0 %v639
    %674 = vmatprep.subr.mxu0 0.0
    %675 = vmatpush1.msra.mxu0 %v636
    %676 = vmatprep.subr.mxu0 0.0
    %677 = vmatpush1.msra.mxu0 %v633
    %678 = vmatprep.subr.mxu0 0.0
    %679 = vmatpush1.msra.mxu0 %v630
    %680 = vmatprep.subr.mxu0 0.0
    %681 = vmatpush1.msra.mxu0 %v627
    %682 = vmatprep.subr.mxu0 0.0
    %683 = vmatpush1.msra.mxu0 %v624
    %684 = vmatprep.subr.mxu0 0.0
    %685 = vmatpush2.msra.mxu0 0.0
    %686 = vmatprep.subr.mxu0 0.0
    %687 = vmatpush2.msra.mxu0 0.0
    %688 = vmatprep.subr.mxu0 0.0
    %689 = vmatpush2.msra.mxu0 0.0
    %690 = vmatprep.subr.mxu0 0.0
    %691 = vmatpush2.msra.mxu0 0.0
    %692 = vmatprep.subr.mxu0 0.0
    %693 = vmatpush2.msra.mxu0 0.0
    %694 = vmatprep.subr.mxu0 0.0
    %695 = vmatpush2.msra.mxu0 0.0
    %696 = vmatprep.subr.mxu0 0.0
    %697 = vmatpush2.msra.mxu0 0.0
    %698 = vmatprep.subr.mxu0 0.0
    %699 = vmatpush2.msra.mxu0 0.0
    %700 = vmatprep.subr.mxu0 0.0
    %701 = vmatpush2.msra.mxu0 0.0
    %702 = vmatprep.subr.mxu0 0.0
    %703 = vmatpush2.msra.mxu0 0.0
    %704 = vmatprep.subr.mxu0 0.0
    %705 = vmatpush2.msra.mxu0 0.0
    %706 = vmatprep.subr.mxu0 0.0
    %707 = vmatpush2.msra.mxu0 0.0
    %708 = vmatprep.subr.mxu0 0.0
    %709 = vmatpush2.msra.mxu0 0.0
    %710 = vmatprep.subr.mxu0 0.0
    %711 = vmatpush2.msra.mxu0 0.0
    %712 = vmatprep.subr.mxu0 0.0
    %713 = vmatpush2.msra.mxu0 0.0
    %714 = vmatprep.subr.mxu0 0.0
    %715 = vmatpush2.msra.mxu0 0.0
    %716 = vmatprep.mubr.f32.mxu0 0.0
    %717 = vmatmul.mubr.f32.gmra.mxu0 %v646
    %v718 = vpop.f32.mrf.mxu0
    %v719 = vadd.f32 %v644, %v718
    %v720 = vpop.f32.mrf.mxu0
    %721 = vdwg.mxu0
    %v722 = vrcp.pop 28.0
    %v723 = vmul.f32 %v719, %v722
    %v724 = vsub.f32 0.0, %v723
    %v725 = vmul.f32 %v724, 1.442695
    %v726 = vpow.pop %v725
    %v727 = vadd.f32 %v726, 1.0
    %v728 = vrcp.pop %v727
    %v729 = vmul.f32 1.0, %v728
    %vm730 = vcmask 0
    %731 = vst.msk [vmem:[#allocation3] sm:$0x1] %vm730, %v729
    // Predicated region
    $region42: #{tpu_custom_call.1} parent=1 // pred_check
      _
    $region43: #{tpu_custom_call.1} parent=1 // pred_check_branch
      %733 = sbr.rel (0) target = $region45
    $region44: #{tpu_custom_call.1} parent=1 // pred_region
      %s735 = ssub.s32 16, 16
      %736 = vsyncadd [#allocation4], %s735
      %s738 = sshll.u32 [#allocation3], 4
      %s739 = int_to_ptr.vmem [resolvable:$true] %s738
      %741 = dma.vmem_to_hbm [thread:$0]  %s739, 16, %s10, [#allocation4]
    $region45: #{tpu_custom_call.1} parent=1 // pred_fallthru
      _
    // Predicated region
    $region46: #{tpu_custom_call.1} parent=1 // pred_check
      _
    $region47: #{tpu_custom_call.1} parent=1 // pred_check_branch
      %743 = sbr.rel (0) target = $region49
    $region48: #{tpu_custom_call.1} parent=1 // pred_region
      %744 = dma.done [#allocation4], 16
    $region49: #{tpu_custom_call.1} parent=1 // pred_fallthru
      _
    %745 = vsyncpa [#allocation4], 1

</llo_original>
